<compile_context>
chip_gen: v7x
topology: tpu7x:2x2x1
jax: 0.10.0
libtpu: 0.0.40
codegen_flags: <defaults>
</compile_context>

<pallas_src>
import functools

import numpy as np
import jax
import jax.numpy as jnp
from jax.experimental import pallas as pl
from jax.experimental.pallas import tpu as pltpu

# ---- Module hyper-parameters (match KANEmbeddings defaults) -----------------
GP_GRID_MIN = -2.0
GP_GRID_MAX = 2.0
GP_NUM_GRIDS = 8
GP_LENGTH_SCALE = 1.0


def _round_up(n, m):
    return ((n + m - 1) // m) * m


def _cdiv(a, b):
    return -(-a // b)


def _kan_embed_kernel(x_ref, expand_ref, meta_ref, w_ref, o_ref, *, inv_length_scale):
    """One batch tile of the KANEmbeddings forward (flattened, lane-dense).

    x_ref:      (TB, F)     input features
    expand_ref: (F, FC)     block-diagonal expansion matrix (compile-time constants)
    meta_ref:   (2, FC)     row 0: 1.0 for the SiLU slot / 0.0 for RBF slots
                            row 1: RBF grid center for each column
    w_ref:      (FC, F*D)   block-diagonal packed [base_weight | gp_weight]
    o_ref:      (TB, F*D)   flattened output tile (lane-dense)
    """
    x = x_ref[...].astype(jnp.float32)            # (TB, F)
    expand = expand_ref[...]                      # (F, FC)
    meta = meta_ref[...]                          # (2, FC)
    w = w_ref[...]                                # (FC, FD)

    is_base = meta[0:1, :] > 0.5                  # (1, FC)
    center = meta[1:2, :]                         # (1, FC)

    # Lane-dense feature expansion on the MXU: xe[:, f*(G+1)+j] = x[:, f].
    xe = jnp.dot(x, expand, preferred_element_type=jnp.float32)   # (TB, FC)

    # One exp serves both the SiLU (base) slot and the RBF slots.
    z = (xe - center) * inv_length_scale
    arg = jnp.where(is_base, -xe, -0.5 * (z * z))
    e = jnp.exp(arg)                              # exp(-x) on base slots, RBF elsewhere
    silu = xe * pl.reciprocal(1.0 + e, approx=True)
    phi = jnp.where(is_base, silu, e)             # (TB, FC)

    # Fused base + GP contribution in a single lane-dense matmul.
    # TODO(synk): on v6e/v7x cast phi/w to bf16 here (keep f32 accumulation)
    # once FC grows enough for the matmul to leave the DMA shadow.
    o_ref[...] = jnp.dot(phi, w, preferred_element_type=jnp.float32).astype(o_ref.dtype)


@functools.partial(jax.jit, static_argnames=("tile_b", "out_dtype"))
def kan_embeddings_forward(x, base_weight, gp_weight, *, tile_b=512, out_dtype=None):
    """x: (B, F); base_weight: (F, D); gp_weight: (F, G, D) -> (B, F, D).

    out_dtype=jnp.bfloat16 halves output HBM traffic (this kernel is
    output-write bound); the default keeps the module's float32.
    """
    B, F = x.shape
    Fw, D = base_weight.shape
    G = gp_weight.shape[1]
    assert Fw == F and gp_weight.shape == (F, G, D)
    assert G >= 2, "gp_num_grids must be >= 2 (grid step divides by G-1)"
    FC = F * (G + 1)
    FD = F * D
    out_dtype = x.dtype if out_dtype is None else out_dtype

    # ---- compile-time per-column metadata (numpy; nothing rebuilt per step) --
    col = np.arange(FC)
    feat = col // (G + 1)                         # owning feature per column
    slot = col % (G + 1)                          # 0 -> SiLU slot, 1..G -> RBF slots
    expand_np = (feat[None, :] == np.arange(F)[:, None]).astype(np.float32)  # (F, FC)
    step = (GP_GRID_MAX - GP_GRID_MIN) / (G - 1)
    center_np = np.where(slot == 0, 0.0, GP_GRID_MIN + step * (slot - 1.0))
    meta_np = np.stack([(slot == 0).astype(np.float32),
                        center_np.astype(np.float32)], axis=0)               # (2, FC)
    expand = jnp.asarray(expand_np)
    meta = jnp.asarray(meta_np)

    # ---- block-diagonal weight packing via static scatter (no 4-D broadcast
    # intermediate).
    # TODO(synk): for large n_features this matrix is O(F^2 * (G+1) * D); switch
    # to a per-feature grid axis (per-feature (G+1, D) weight block writing a
    # (TB, D) sub-slab) before it pressures v7x's 64 MiB VMEM.
    packed = jnp.concatenate(
        [base_weight[:, None, :].astype(jnp.float32),
         gp_weight.astype(jnp.float32)],
        axis=1)                                                               # (F, G+1, D)
    row_idx = np.arange(F)[:, None, None] * (G + 1) + np.arange(G + 1)[None, :, None]
    col_idx = np.arange(F)[:, None, None] * D + np.arange(D)[None, None, :]
    w = jnp.zeros((FC, FD), jnp.float32).at[row_idx, col_idx].set(packed)

    # ---- batch tiling: pad only to a multiple of 8; keep >= 2 grid steps so
    # both v7x TensorCores get work; partial last block is handled by Pallas.
    B8 = _round_up(B, 8)
    tb = max(8, min(tile_b, _round_up(_cdiv(B8, 2), 8)))
    n_steps = _cdiv(B8, tb)
    xp = jnp.pad(x, ((0, B8 - B), (0, 0))) if B8 != B else x

    kernel = functools.partial(_kan_embed_kernel,
                               inv_length_scale=1.0 / GP_LENGTH_SCALE)

    out_flat = pl.pallas_call(
        kernel,
        out_shape=jax.ShapeDtypeStruct((B8, FD), out_dtype),
        grid_spec=pl.GridSpec(
            grid=(n_steps,),
            in_specs=[
                pl.BlockSpec((tb, F), lambda i: (i, 0)),      # x tile
                pl.BlockSpec((F, FC), lambda i: (0, 0)),      # expansion matrix
                pl.BlockSpec((2, FC), lambda i: (0, 0)),      # slot flags / centers
                pl.BlockSpec((FC, FD), lambda i: (0, 0)),     # packed weights
            ],
            out_specs=pl.BlockSpec((tb, FD), lambda i: (i, 0)),  # lane-dense output
        ),
        compiler_params=pltpu.CompilerParams(
            dimension_semantics=("parallel",),
        ),
    )(xp, expand, meta, w)

    return out_flat[:B].reshape(B, F, D)


def _reference_forward(x, base_weight, gp_weight, grid):
    """Pure-JAX reference mirroring the PyTorch module exactly."""
    silu = x * jax.nn.sigmoid(x)
    base_out = silu[:, :, None] * base_weight[None, :, :]
    dist = x[:, :, None] - grid.reshape(1, 1, -1)
    phi = jnp.exp(-0.5 * (dist / GP_LENGTH_SCALE) ** 2)
    gp_out = jnp.einsum("bfg,fgd->bfd", phi, gp_weight)
    return base_out + gp_out


if __name__ == "__main__":
    # Small shapes consistent with the module's forward: x is (batch, n_features).
    B = 256           # batch
    F = 4             # n_features
    D = 32            # d_embedding
    G = GP_NUM_GRIDS  # gp_num_grids

    key = jax.random.PRNGKey(0)
    kx, kb, kg = jax.random.split(key, 3)

    # Deterministic synthetic parameters (shapes from __init__):
    #   base_weight: (n_features, d_embedding)       [kaiming-uniform in torch]
    #   gp_weight:   (n_features, num_grids, d_emb)  [trunc_normal(std=0.1)]
    x = jax.random.normal(kx, (B, F), dtype=jnp.float32)
    base_weight = (jax.random.uniform(kb, (F, D), dtype=jnp.float32) - 0.5) * 0.5
    gp_weight = 0.1 * jax.random.normal(kg, (F, G, D), dtype=jnp.float32)

    out = kan_embeddings_forward(x, base_weight, gp_weight)
    out = jax.block_until_ready(out)

    grid = jnp.linspace(GP_GRID_MIN, GP_GRID_MAX, G, dtype=jnp.float32)
    ref = _reference_forward(x, base_weight, gp_weight, grid)
    assert out.shape == (B, F, D)
    max_err = float(jnp.max(jnp.abs(out - ref)))
    assert jnp.allclose(out, ref, atol=2e-3, rtol=2e-3), (
        f"mismatch vs reference, max abs err={max_err}")

    print("KERNEL_OK")
</pallas_src>

<mosaic_0001>
module attributes {stable_mosaic.version = 11 : i64} {
  func.func @_kan_embed_kernel(%arg0: i32, %arg1: memref<128x4xf32, #tpu.memory_space<vmem>>, %arg2: memref<4x36xf32, #tpu.memory_space<vmem>>, %arg3: memref<2x36xf32, #tpu.memory_space<vmem>>, %arg4: memref<36x128xf32, #tpu.memory_space<vmem>>, %arg5: memref<128x128xf32, #tpu.memory_space<vmem>>) attributes {dimension_semantics = [#tpu.dimension_semantics<parallel>], iteration_bounds = array<i64: 2>, scalar_prefetch = 0 : i64, scratch_operands = 0 : i64, tpu.core_type = #tpu.core_type<tc>, window_params = [{transform_indices = @transform_0, window_bounds = array<i64: 128, 4>}, {pipeline_mode = #tpu.pipeline_mode<synchronous>, transform_indices = @transform_1, window_bounds = array<i64: 4, 36>}, {pipeline_mode = #tpu.pipeline_mode<synchronous>, transform_indices = @transform_2, window_bounds = array<i64: 2, 36>}, {pipeline_mode = #tpu.pipeline_mode<synchronous>, transform_indices = @transform_3, window_bounds = array<i64: 36, 128>}, {transform_indices = @transform_4, window_bounds = array<i64: 128, 128>}]} {
    %c0 = arith.constant 0 : index
    %c0_0 = arith.constant 0 : index
    %0 = vector.load %arg1[%c0, %c0_0] : memref<128x4xf32, #tpu.memory_space<vmem>>, vector<128x4xf32>
    %c0_1 = arith.constant 0 : index
    %c0_2 = arith.constant 0 : index
    %1 = vector.load %arg2[%c0_1, %c0_2] : memref<4x36xf32, #tpu.memory_space<vmem>>, vector<4x36xf32>
    %c0_3 = arith.constant 0 : index
    %c0_4 = arith.constant 0 : index
    %2 = vector.load %arg3[%c0_3, %c0_4] : memref<2x36xf32, #tpu.memory_space<vmem>>, vector<2x36xf32>
    %c0_5 = arith.constant 0 : index
    %c0_6 = arith.constant 0 : index
    %3 = vector.load %arg4[%c0_5, %c0_6] : memref<36x128xf32, #tpu.memory_space<vmem>>, vector<36x128xf32>
    %4 = vector.extract_strided_slice %2 {offsets = [0, 0], sizes = [1, 36], strides = [1, 1]} : vector<2x36xf32> to vector<1x36xf32>
    %cst = arith.constant 5.000000e-01 : f32
    %5 = vector.broadcast %cst : f32 to vector<1x36xf32>
    %6 = arith.cmpf ogt, %4, %5 : vector<1x36xf32>
    %7 = vector.extract_strided_slice %2 {offsets = [1, 0], sizes = [1, 36], strides = [1, 1]} : vector<2x36xf32> to vector<1x36xf32>
    %cst_7 = arith.constant dense<0.000000e+00> : vector<128x36xf32>
    %8 = tpu.matmul %0, %1, %cst_7 {dimension_numbers = #tpu.dot_dimension_numbers<[1], [0], [0], [1], [0, 0, 1, 1], [], []>} : vector<128x4xf32>, vector<4x36xf32>, vector<128x36xf32> -> vector<128x36xf32>
    %9 = vector.broadcast %7 : vector<1x36xf32> to vector<128x36xf32>
    %10 = arith.subf %8, %9 : vector<128x36xf32>
    %cst_8 = arith.constant 1.000000e+00 : f32
    %11 = vector.broadcast %cst_8 : f32 to vector<128x36xf32>
    %12 = arith.mulf %10, %11 : vector<128x36xf32>
    %cst_9 = arith.constant 0.000000e+00 : f32
    %13 = vector.broadcast %cst_9 : f32 to vector<128x36xf32>
    %14 = arith.subf %13, %8 : vector<128x36xf32>
    %15 = arith.mulf %12, %12 : vector<128x36xf32>
    %cst_10 = arith.constant -5.000000e-01 : f32
    %16 = vector.broadcast %cst_10 : f32 to vector<128x36xf32>
    %17 = arith.mulf %16, %15 : vector<128x36xf32>
    %18 = vector.shape_cast %6 : vector<1x36xi1> to vector<1x36xi1>
    %19 = vector.broadcast %18 : vector<1x36xi1> to vector<128x36xi1>
    %20 = arith.select %19, %14, %17 : vector<128x36xi1>, vector<128x36xf32>
    %21 = math.exp %20 : vector<128x36xf32>
    %cst_11 = arith.constant 1.000000e+00 : f32
    %22 = vector.broadcast %cst_11 : f32 to vector<128x36xf32>
    %23 = arith.addf %22, %21 : vector<128x36xf32>
    %24 = tpu.reciprocal %23 {approx = true} : vector<128x36xf32> -> vector<128x36xf32>
    %25 = arith.mulf %8, %24 : vector<128x36xf32>
    %26 = vector.shape_cast %6 : vector<1x36xi1> to vector<1x36xi1>
    %27 = vector.broadcast %26 : vector<1x36xi1> to vector<128x36xi1>
    %28 = arith.select %27, %25, %21 : vector<128x36xi1>, vector<128x36xf32>
    %cst_12 = arith.constant dense<0.000000e+00> : vector<128x128xf32>
    %29 = tpu.matmul %28, %3, %cst_12 {dimension_numbers = #tpu.dot_dimension_numbers<[1], [0], [0], [1], [0, 0, 1, 1], [], []>} : vector<128x36xf32>, vector<36x128xf32>, vector<128x128xf32> -> vector<128x128xf32>
    %c0_13 = arith.constant 0 : index
    %c0_14 = arith.constant 0 : index
    %30 = vector.load %arg5[%c0_13, %c0_14] : memref<128x128xf32, #tpu.memory_space<vmem>>, vector<128x128xf32>
    tpu.vector_store %arg5[%c0_13, %c0_14], %29 {strides = array<i32>} : memref<128x128xf32, #tpu.memory_space<vmem>>, vector<128x128xf32>,
    return
  }
  func.func @transform_0(%arg0: i32) -> (i32, i32) {
    %c0_i32 = arith.constant 0 : i32
    %c0_i32_0 = arith.constant 0 : i32
    return %arg0, %c0_i32 : i32, i32
  }
  func.func @transform_1(%arg0: i32) -> (i32, i32) {
    %c0_i32 = arith.constant 0 : i32
    %c0_i32_0 = arith.constant 0 : i32
    %c0_i32_1 = arith.constant 0 : i32
    return %c0_i32, %c0_i32_0 : i32, i32
  }
  func.func @transform_2(%arg0: i32) -> (i32, i32) {
    %c0_i32 = arith.constant 0 : i32
    %c0_i32_0 = arith.constant 0 : i32
    %c0_i32_1 = arith.constant 0 : i32
    return %c0_i32, %c0_i32_0 : i32, i32
  }
  func.func @transform_3(%arg0: i32) -> (i32, i32) {
    %c0_i32 = arith.constant 0 : i32
    %c0_i32_0 = arith.constant 0 : i32
    %c0_i32_1 = arith.constant 0 : i32
    return %c0_i32, %c0_i32_0 : i32, i32
  }
  func.func @transform_4(%arg0: i32) -> (i32, i32) {
    %c0_i32 = arith.constant 0 : i32
    %c0_i32_0 = arith.constant 0 : i32
    return %arg0, %c0_i32 : i32, i32
  }
}

</mosaic_0001>

<llo_original>
// kernel: kan_embeddings_forward.1
$region0: #{kan_embeddings_forward.1}
  #allocation0 [shape = 'u32[]', space=smem, size = 0x4, offset = 0x4, fixed_abs, tag = 'smem constant byte address 0x4 - core index']
  #allocation1 [shape = 'u32[144,128]{1,0:T(1,128)}', space=vmem, size = 0x12000, scoped, tag = 'internal scratch']
  %s0 = inlined_call_operand.vmem [shape: f32[256,4], index: 0, kind: input, shape index: {}]
  %s1 = inlined_call_operand.vmem [shape: f32[4,36], index: 1, kind: input, shape index: {}]
  %s2 = inlined_call_operand.vmem [shape: f32[2,36], index: 2, kind: input, shape index: {}]
  %s3 = inlined_call_operand.vmem [shape: f32[36,128], index: 3, kind: input, shape index: {}]
  %s4 = inlined_call_operand.vmem [shape: f32[256,128], index: 4, kind: output, shape index: {}]
  %s5 = sld [smem:[#allocation0]]
  $region49: #{kan_embeddings_forward.1} parent=0
    _
  %s7 = ssub.s32 1, %s5
  %s8 = scalar_select 0, %s7, %s5
  loop: start=0, step=1, limit=4
  $region2: #{kan_embeddings_forward.1} parent=0 // loop_pre_header
    _
  $region3: #{kan_embeddings_forward.1} parent=0 // loop_header
    %s10 = sphi 0, %s14
    %p11 = scmp.ge.s32.totalorder %s10, 4
    %s20 = sphi 0, %s22
    %s23 = sphi 0, %s20
    %s24 = sphi 0, %s23
    %s40 = sphi 0, %s24
    %s44 = sphi 0, %s44
    %s46 = sphi 0, %s44
    %s47 = sphi 0, %s46
    %s61 = sphi 0, %s47
    %s65 = sphi 0, %s65
    %s67 = sphi 0, %s65
    %s68 = sphi 0, %s67
    %s82 = sphi 0, %s68
    %s86 = sphi 0, %s86
    %s88 = sphi 0, %s86
    %s89 = sphi 0, %s88
    %s103 = sphi 0, %s89
    %s109 = sphi 0, %s111
    %s112 = sphi 0, %s109
    %s113 = sphi 0, %s112
    %s129 = sphi 0, %s113
  $region4: #{kan_embeddings_forward.1} parent=0 // loop_header_branch
    %13 = sbr.rel (%p11) target = $region8
  $region5: #{kan_embeddings_forward.1} parent=0 // loop_body
    %s15 = ssub.s32 %s10, 1
    %s16 = ssub.s32 %s10, 2
    %s17 = sadd.s32 %s10, 1
    %s18 = ssub.s32 %s10, %s17
    %p19 = scmp.eq.s32.totalorder %s18, 0
    %s21 = sadd.s32 %s20, 1
    %s22 = scalar_select %p19, %s20, %s21
    %p25 = pneg %p19
    %p26 = scmp.eq.s32.totalorder %s10, 1
    %p27 = por %p25, %p26
    %p28 = scmp.ne.s32.totalorder %s20, %s23
    %p29 = scmp.eq.s32.totalorder %s10, 0
    %p30 = por %p28, %p29
    %p31 = scmp.ne.s32.totalorder %s20, %s23
    %p32 = scmp.eq.s32.totalorder %s15, 1
    %p33 = por %p31, %p32
    %p34 = scmp.ne.s32.totalorder %s23, %s24
    %p35 = scmp.eq.s32.totalorder %s15, 0
    %p36 = por %p34, %p35
    %p37 = scmp.ne.s32.totalorder %s23, %s24
    %p38 = scmp.eq.s32.totalorder %s16, 1
    %p39 = por %p37, %p38
    %p41 = scmp.ne.s32.totalorder %s24, %s40
    %p42 = scmp.eq.s32.totalorder %s16, 0
    %p43 = por %p41, %p42
    %s45 = sadd.s32 %s44, 1
    %p48 = scmp.eq.s32.totalorder %s10, 1
    %p49 = scmp.ne.s32.totalorder %s44, %s46
    %p50 = scmp.eq.s32.totalorder %s10, 0
    %p51 = por %p49, %p50
    %p52 = scmp.ne.s32.totalorder %s44, %s46
    %p53 = scmp.eq.s32.totalorder %s15, 1
    %p54 = por %p52, %p53
    %p55 = scmp.ne.s32.totalorder %s46, %s47
    %p56 = scmp.eq.s32.totalorder %s15, 0
    %p57 = por %p55, %p56
    %p58 = scmp.ne.s32.totalorder %s46, %s47
    %p59 = scmp.eq.s32.totalorder %s16, 1
    %p60 = por %p58, %p59
    %p62 = scmp.ne.s32.totalorder %s47, %s61
    %p63 = scmp.eq.s32.totalorder %s16, 0
    %p64 = por %p62, %p63
    %s66 = sadd.s32 %s65, 1
    %p69 = scmp.eq.s32.totalorder %s10, 1
    %p70 = scmp.ne.s32.totalorder %s65, %s67
    %p71 = scmp.eq.s32.totalorder %s10, 0
    %p72 = por %p70, %p71
    %p73 = scmp.ne.s32.totalorder %s65, %s67
    %p74 = scmp.eq.s32.totalorder %s15, 1
    %p75 = por %p73, %p74
    %p76 = scmp.ne.s32.totalorder %s67, %s68
    %p77 = scmp.eq.s32.totalorder %s15, 0
    %p78 = por %p76, %p77
    %p79 = scmp.ne.s32.totalorder %s67, %s68
    %p80 = scmp.eq.s32.totalorder %s16, 1
    %p81 = por %p79, %p80
    %p83 = scmp.ne.s32.totalorder %s68, %s82
    %p84 = scmp.eq.s32.totalorder %s16, 0
    %p85 = por %p83, %p84
    %s87 = sadd.s32 %s86, 1
    %p90 = scmp.eq.s32.totalorder %s10, 1
    %p91 = scmp.ne.s32.totalorder %s86, %s88
    %p92 = scmp.eq.s32.totalorder %s10, 0
    %p93 = por %p91, %p92
    %p94 = scmp.ne.s32.totalorder %s86, %s88
    %p95 = scmp.eq.s32.totalorder %s15, 1
    %p96 = por %p94, %p95
    %p97 = scmp.ne.s32.totalorder %s88, %s89
    %p98 = scmp.eq.s32.totalorder %s15, 0
    %p99 = por %p97, %p98
    %p100 = scmp.ne.s32.totalorder %s88, %s89
    %p101 = scmp.eq.s32.totalorder %s16, 1
    %p102 = por %p100, %p101
    %p104 = scmp.ne.s32.totalorder %s89, %s103
    %p105 = scmp.eq.s32.totalorder %s16, 0
    %p106 = por %p104, %p105
    %s107 = ssub.s32 %s10, %s17
    %p108 = scmp.eq.s32.totalorder %s107, 0
    %s110 = sadd.s32 %s109, 1
    %s111 = scalar_select %p108, %s109, %s110
    %p114 = pneg %p108
    %p115 = scmp.eq.s32.totalorder %s10, 1
    %p116 = por %p114, %p115
    %p117 = scmp.ne.s32.totalorder %s109, %s112
    %p118 = scmp.eq.s32.totalorder %s10, 0
    %p119 = por %p117, %p118
    %p120 = scmp.ne.s32.totalorder %s109, %s112
    %p121 = scmp.eq.s32.totalorder %s15, 1
    %p122 = por %p120, %p121
    %p123 = scmp.ne.s32.totalorder %s112, %s113
    %p124 = scmp.eq.s32.totalorder %s15, 0
    %p125 = por %p123, %p124
    %p126 = scmp.ne.s32.totalorder %s112, %s113
    %p127 = scmp.eq.s32.totalorder %s16, 1
    %p128 = por %p126, %p127
    %p130 = scmp.ne.s32.totalorder %s113, %s129
    %p131 = scmp.eq.s32.totalorder %s16, 0
    %p132 = por %p130, %p131
    %p133 = scmp.le.s32.totalorder 1, %s10
    %p134 = scmp.lt.s32.totalorder %s10, 3
    %p135 = pnand %p133, %p134
    %p136 = pneg %p135
    // Predicated region
    $region9: #{kan_embeddings_forward.1} parent=5 // pred_check
      _
    $region10: #{kan_embeddings_forward.1} parent=5 // pred_check_branch
      %138 = sbr.rel (%p135) target = $region12
    $region11: #{kan_embeddings_forward.1} parent=5 // pred_region
      %s139 = ssub.s32 %s10, 1
      // Predicated region
      $region13: #{kan_embeddings_forward.1} parent=11 // pred_check
        %p140 = pneg %p57
      $region14: #{kan_embeddings_forward.1} parent=11 // pred_check_branch
        %142 = sbr.rel (%p140) target = $region16
      $region15: #{kan_embeddings_forward.1} parent=11 // pred_region
        _
      $region16: #{kan_embeddings_forward.1} parent=11 // pred_fallthru
        _
      // Predicated region
      $region17: #{kan_embeddings_forward.1} parent=11 // pred_check
        %p143 = pneg %p78
      $region18: #{kan_embeddings_forward.1} parent=11 // pred_check_branch
        %145 = sbr.rel (%p143) target = $region20
      $region19: #{kan_embeddings_forward.1} parent=11 // pred_region
        _
      $region20: #{kan_embeddings_forward.1} parent=11 // pred_fallthru
        _
      // Predicated region
      $region21: #{kan_embeddings_forward.1} parent=11 // pred_check
        %p146 = pneg %p99
      $region22: #{kan_embeddings_forward.1} parent=11 // pred_check_branch
        %148 = sbr.rel (%p146) target = $region24
      $region23: #{kan_embeddings_forward.1} parent=11 // pred_region
        _
      $region24: #{kan_embeddings_forward.1} parent=11 // pred_fallthru
        _
    $region12: #{kan_embeddings_forward.1} parent=5 // pred_fallthru
      _
    %p149 = scmp.lt.s32.totalorder %s10, 2
    // Predicated region
    $region25: #{kan_embeddings_forward.1} parent=5 // pred_check
      %p150 = pneg %p149
    $region26: #{kan_embeddings_forward.1} parent=5 // pred_check_branch
      %152 = sbr.rel (%p150) target = $region28
    $region27: #{kan_embeddings_forward.1} parent=5 // pred_region
      // Predicated region
      $region29: #{kan_embeddings_forward.1} parent=27 // pred_check
        %p153 = pneg %p30
      $region30: #{kan_embeddings_forward.1} parent=27 // pred_check_branch
        %155 = sbr.rel (%p153) target = $region32
      $region31: #{kan_embeddings_forward.1} parent=27 // pred_region
        %s156 = smul.u32 16, %s10
        %p157 = scmp.lt.s32.totalorder %s156, 31
        %s158 = scalar_select %p157, %s156, 31
        %s159 = smul.addr %s158, 8
        %s160 = scalar_lea.vmem %s0, %s159
        %s161 = smul.u32 16, %s10
      $region32: #{kan_embeddings_forward.1} parent=27 // pred_fallthru
        _
    $region28: #{kan_embeddings_forward.1} parent=5 // pred_fallthru
      _
    %p162 = scmp.le.s32.totalorder 1, %s10
    %p163 = scmp.lt.s32.totalorder %s10, 3
    %p164 = pnand %p162, %p163
    %p165 = pneg %p164
    // Predicated region
    $region33: #{kan_embeddings_forward.1} parent=5 // pred_check
      _
    $region34: #{kan_embeddings_forward.1} parent=5 // pred_check_branch
      %167 = sbr.rel (%p164) target = $region36
    $region35: #{kan_embeddings_forward.1} parent=5 // pred_region
      %s168 = ssub.s32 %s10, 1
      %s169 = smul.u32 16, %s15
      %p170 = scmp.lt.s32.totalorder %s169, 31
      %s171 = scalar_select %p170, %s169, 31
      %s172 = smul.addr %s171, 8
      %s173 = scalar_lea.vmem %s0, %s172
      %p174 = pneg %p36
      %p175 = pneg %p33
      %p176 = pneg %p57
      %p177 = pneg %p54
      %p178 = pneg %p78
      %p179 = pneg %p75
      %p180 = pneg %p99
      %p181 = pneg %p96
      %p182 = pneg %p125
      %p183 = pneg %p122
      %s184 = smul.u32 16, %s15
      %p185 = scmp.lt.s32.totalorder %s184, 31
      %s186 = scalar_select %p185, %s184, 31
      %s187 = smul.addr %s186, 8
      %s188 = scalar_lea.vmem %s4, %s187
      %s189 = smul.u32 16, %s15
      %p190 = scmp.lt.s32.totalorder %s189, 31
      %s191 = scalar_select %p190, %s189, 31
      %s192 = smul.addr %s191, 8
      %s193 = scalar_lea.vmem %s0, %s192
      %s194 = smul.u32 16, %s15
      %s195 = smul.u32 16, %s15
      %p196 = scmp.lt.s32.totalorder %s195, 31
      %s197 = scalar_select %p196, %s195, 31
      %s198 = smul.addr %s197, 8
      %s199 = scalar_lea.vmem %s4, %s198
      %s200 = smul.u32 16, %s15
      %v201 = vld [vmem:[%s193] sm:$0xff]
      %v202 = vld [vmem:[%s193 + $0x8] sm:$0xff]
      %v203 = vld [vmem:[%s193 + $0x10] sm:$0xff]
      %v204 = vld [vmem:[%s193 + $0x18] sm:$0xff]
      %v205 = vld [vmem:[%s193 + $0x20] sm:$0xff]
      %v206 = vld [vmem:[%s193 + $0x28] sm:$0xff]
      %v207 = vld [vmem:[%s193 + $0x30] sm:$0xff]
      %v208 = vld [vmem:[%s193 + $0x38] sm:$0xff]
      %v209 = vld [vmem:[%s193 + $0x40] sm:$0xff]
      %v210 = vld [vmem:[%s193 + $0x48] sm:$0xff]
      %v211 = vld [vmem:[%s193 + $0x50] sm:$0xff]
      %v212 = vld [vmem:[%s193 + $0x58] sm:$0xff]
      %v213 = vld [vmem:[%s193 + $0x60] sm:$0xff]
      %v214 = vld [vmem:[%s193 + $0x68] sm:$0xff]
      %v215 = vld [vmem:[%s193 + $0x70] sm:$0xff]
      %v216 = vld [vmem:[%s193 + $0x78] sm:$0xff]
      %v217 = vld [vmem:[%s1] sm:$0xf]
      %v218 = vld [vmem:[%s2] sm:$0x3]
      %v219 = vld [vmem:[%s3] sm:$0xff]
      %v220 = vld [vmem:[%s3 + $0x8] sm:$0xff]
      %v221 = vld [vmem:[%s3 + $0x10] sm:$0xff]
      %v222 = vld [vmem:[%s3 + $0x18] sm:$0xff]
      %v223 = vld [vmem:[%s3 + $0x20] sm:$0xf]
      %vm224 = vcmp.gt.f32.partialorder %v218, 0.5
      %vm225 = vcmask 31744
      %v227 = vsel %vm225, %v201, 0
      %v230 = vsel %vm225, %v202, 0
      %v233 = vsel %vm225, %v203, 0
      %v236 = vsel %vm225, %v204, 0
      %v239 = vsel %vm225, %v205, 0
      %v242 = vsel %vm225, %v206, 0
      %v245 = vsel %vm225, %v207, 0
      %v248 = vsel %vm225, %v208, 0
      %v251 = vsel %vm225, %v209, 0
      %v254 = vsel %vm225, %v210, 0
      %v257 = vsel %vm225, %v211, 0
      %v260 = vsel %vm225, %v212, 0
      %v263 = vsel %vm225, %v213, 0
      %v266 = vsel %vm225, %v214, 0
      %v269 = vsel %vm225, %v215, 0
      %v272 = vsel %vm225, %v216, 0
      %vm274 = vcmask 1043456
      %v276 = vsel %vm274, %v217, 0
      %278 = vmatprep.subr.mxu0 0.0
      %279 = vmatpush1.msra.mxu0 %v276
      %280 = vmatprep.subr.mxu0 0.0
      %281 = vmatpush1.msra.mxu0 0.0
      %282 = vmatprep.subr.mxu0 0.0
      %283 = vmatpush1.msra.mxu0 0.0
      %284 = vmatprep.subr.mxu0 0.0
      %285 = vmatpush1.msra.mxu0 0.0
      %286 = vmatprep.subr.mxu0 0.0
      %287 = vmatpush1.msra.mxu0 0.0
      %288 = vmatprep.subr.mxu0 0.0
      %289 = vmatpush1.msra.mxu0 0.0
      %290 = vmatprep.subr.mxu0 0.0
      %291 = vmatpush1.msra.mxu0 0.0
      %292 = vmatprep.subr.mxu0 0.0
      %293 = vmatpush1.msra.mxu0 0.0
      %294 = vmatprep.subr.mxu0 0.0
      %295 = vmatpush1.msra.mxu0 0.0
      %296 = vmatprep.subr.mxu0 0.0
      %297 = vmatpush1.msra.mxu0 0.0
      %298 = vmatprep.subr.mxu0 0.0
      %299 = vmatpush1.msra.mxu0 0.0
      %300 = vmatprep.subr.mxu0 0.0
      %301 = vmatpush1.msra.mxu0 0.0
      %302 = vmatprep.subr.mxu0 0.0
      %303 = vmatpush1.msra.mxu0 0.0
      %304 = vmatprep.subr.mxu0 0.0
      %305 = vmatpush1.msra.mxu0 0.0
      %306 = vmatprep.subr.mxu0 0.0
      %307 = vmatpush1.msra.mxu0 0.0
      %308 = vmatprep.subr.mxu0 0.0
      %309 = vmatpush1.msra.mxu0 0.0
      %310 = vmatprep.subr.mxu0 0.0
      %311 = vmatpush1.msra.mxu0 0.0
      %312 = vmatprep.subr.mxu0 0.0
      %313 = vmatpush1.msra.mxu0 0.0
      %314 = vmatprep.subr.mxu0 0.0
      %315 = vmatpush1.msra.mxu0 0.0
      %316 = vmatprep.subr.mxu0 0.0
      %317 = vmatpush1.msra.mxu0 0.0
      %318 = vmatprep.subr.mxu0 0.0
      %319 = vmatpush1.msra.mxu0 0.0
      %320 = vmatprep.subr.mxu0 0.0
      %321 = vmatpush1.msra.mxu0 0.0
      %322 = vmatprep.subr.mxu0 0.0
      %323 = vmatpush1.msra.mxu0 0.0
      %324 = vmatprep.subr.mxu0 0.0
      %325 = vmatpush1.msra.mxu0 0.0
      %326 = vmatprep.subr.mxu0 0.0
      %327 = vmatpush1.msra.mxu0 0.0
      %328 = vmatprep.subr.mxu0 0.0
      %329 = vmatpush1.msra.mxu0 0.0
      %330 = vmatprep.subr.mxu0 0.0
      %331 = vmatpush1.msra.mxu0 0.0
      %332 = vmatprep.subr.mxu0 0.0
      %333 = vmatpush1.msra.mxu0 0.0
      %334 = vmatprep.subr.mxu0 0.0
      %335 = vmatpush1.msra.mxu0 0.0
      %336 = vmatprep.subr.mxu0 0.0
      %337 = vmatpush1.msra.mxu0 0.0
      %338 = vmatprep.subr.mxu0 0.0
      %339 = vmatpush1.msra.mxu0 0.0
      %340 = vmatprep.subr.mxu0 0.0
      %341 = vmatpush1.msra.mxu0 0.0
      %342 = vmatprep.mubr.f32.mxu0 0.0
      %343 = vmatmul.mubr.f32.gmra.mrb[0].mxu0 %v227
      %v344 = vpop.f32.mrb[0].mxu0
      %v345 = vadd.f32 0.0, %v344
      %v346 = vpop.f32.mrb[0].mxu0
      %347 = vmatprep.mubr.f32.mxu0 0.0
      %348 = vmatmul.mubr.f32.gmra.mrb[0].mxu0 %v230
      %v349 = vpop.f32.mrb[0].mxu0
      %v350 = vadd.f32 0.0, %v349
      %v351 = vpop.f32.mrb[0].mxu0
      %352 = vmatprep.mubr.f32.mxu0 0.0
      %353 = vmatmul.mubr.f32.gmra.mrb[0].mxu0 %v233
      %v354 = vpop.f32.mrb[0].mxu0
      %v355 = vadd.f32 0.0, %v354
      %v356 = vpop.f32.mrb[0].mxu0
      %357 = vmatprep.mubr.f32.mxu0 0.0
      %358 = vmatmul.mubr.f32.gmra.mrb[0].mxu0 %v236
      %v359 = vpop.f32.mrb[0].mxu0
      %v360 = vadd.f32 0.0, %v359
      %v361 = vpop.f32.mrb[0].mxu0
      %362 = vmatprep.mubr.f32.mxu0 0.0
      %363 = vmatmul.mubr.f32.gmra.mrb[0].mxu0 %v239
      %v364 = vpop.f32.mrb[0].mxu0
      %v365 = vadd.f32 0.0, %v364
      %v366 = vpop.f32.mrb[0].mxu0
      %367 = vmatprep.mubr.f32.mxu0 0.0
      %368 = vmatmul.mubr.f32.gmra.mrb[0].mxu0 %v242
      %v369 = vpop.f32.mrb[0].mxu0
      %v370 = vadd.f32 0.0, %v369
      %v371 = vpop.f32.mrb[0].mxu0
      %372 = vmatprep.mubr.f32.mxu0 0.0
      %373 = vmatmul.mubr.f32.gmra.mrb[0].mxu0 %v245
      %v374 = vpop.f32.mrb[0].mxu0
      %v375 = vadd.f32 0.0, %v374
      %v376 = vpop.f32.mrb[0].mxu0
      %377 = vmatprep.mubr.f32.mxu0 0.0
      %378 = vmatmul.mubr.f32.gmra.mrb[0].mxu0 %v248
      %v379 = vpop.f32.mrb[0].mxu0
      %v380 = vadd.f32 0.0, %v379
      %v381 = vpop.f32.mrb[0].mxu0
      %382 = vmatprep.mubr.f32.mxu0 0.0
      %383 = vmatmul.mubr.f32.gmra.mrb[0].mxu0 %v251
      %v384 = vpop.f32.mrb[0].mxu0
      %v385 = vadd.f32 0.0, %v384
      %v386 = vpop.f32.mrb[0].mxu0
      %387 = vmatprep.mubr.f32.mxu0 0.0
      %388 = vmatmul.mubr.f32.gmra.mrb[0].mxu0 %v254
      %v389 = vpop.f32.mrb[0].mxu0
      %v390 = vadd.f32 0.0, %v389
      %v391 = vpop.f32.mrb[0].mxu0
      %392 = vmatprep.mubr.f32.mxu0 0.0
      %393 = vmatmul.mubr.f32.gmra.mrb[0].mxu0 %v257
      %v394 = vpop.f32.mrb[0].mxu0
      %v395 = vadd.f32 0.0, %v394
      %v396 = vpop.f32.mrb[0].mxu0
      %397 = vmatprep.mubr.f32.mxu0 0.0
      %398 = vmatmul.mubr.f32.gmra.mrb[0].mxu0 %v260
      %v399 = vpop.f32.mrb[0].mxu0
      %v400 = vadd.f32 0.0, %v399
      %v401 = vpop.f32.mrb[0].mxu0
      %402 = vmatprep.mubr.f32.mxu0 0.0
      %403 = vmatmul.mubr.f32.gmra.mrb[0].mxu0 %v263
      %v404 = vpop.f32.mrb[0].mxu0
      %v405 = vadd.f32 0.0, %v404
      %v406 = vpop.f32.mrb[0].mxu0
      %407 = vmatprep.mubr.f32.mxu0 0.0
      %408 = vmatmul.mubr.f32.gmra.mrb[0].mxu0 %v266
      %v409 = vpop.f32.mrb[0].mxu0
      %v410 = vadd.f32 0.0, %v409
      %v411 = vpop.f32.mrb[0].mxu0
      %412 = vmatprep.mubr.f32.mxu0 0.0
      %413 = vmatmul.mubr.f32.gmra.mrb[0].mxu0 %v269
      %v414 = vpop.f32.mrb[0].mxu0
      %v415 = vadd.f32 0.0, %v414
      %v416 = vpop.f32.mrb[0].mxu0
      %417 = vmatprep.mubr.f32.mxu0 0.0
      %418 = vmatmul.mubr.f32.gmra.mrb[0].mxu0 %v272
      %v419 = vpop.f32.mrb[0].mxu0
      %v420 = vadd.f32 0.0, %v419
      %v421 = vpop.f32.mrb[0].mxu0
      %422 = vdwg.mxu0
      %v423 = vlaneseq
      %v424 = vshrl.u32 %v423, 7
      %v425 = vsub.s32 1, %v424
      %v426 = vrot.slane %v218, %v425
      %v427 = vsub.f32 %v345, %v426
      %v428 = vsub.f32 %v350, %v426
      %v429 = vsub.f32 %v355, %v426
      %v430 = vsub.f32 %v360, %v426
      %v431 = vsub.f32 %v365, %v426
      %v432 = vsub.f32 %v370, %v426
      %v433 = vsub.f32 %v375, %v426
      %v434 = vsub.f32 %v380, %v426
      %v435 = vsub.f32 %v385, %v426
      %v436 = vsub.f32 %v390, %v426
      %v437 = vsub.f32 %v395, %v426
      %v438 = vsub.f32 %v400, %v426
      %v439 = vsub.f32 %v405, %v426
      %v440 = vsub.f32 %v410, %v426
      %v441 = vsub.f32 %v415, %v426
      %v442 = vsub.f32 %v420, %v426
      %v443 = vsub.f32 0.0, %v345
      %v444 = vsub.f32 0.0, %v350
      %v445 = vsub.f32 0.0, %v355
      %v446 = vsub.f32 0.0, %v360
      %v447 = vsub.f32 0.0, %v365
      %v448 = vsub.f32 0.0, %v370
      %v449 = vsub.f32 0.0, %v375
      %v450 = vsub.f32 0.0, %v380
      %v451 = vsub.f32 0.0, %v385
      %v452 = vsub.f32 0.0, %v390
      %v453 = vsub.f32 0.0, %v395
      %v454 = vsub.f32 0.0, %v400
      %v455 = vsub.f32 0.0, %v405
      %v456 = vsub.f32 0.0, %v410
      %v457 = vsub.f32 0.0, %v415
      %v458 = vsub.f32 0.0, %v420
      %v459 = vmul.f32 %v427, %v427
      %v460 = vmul.f32 %v428, %v428
      %v461 = vmul.f32 %v429, %v429
      %v462 = vmul.f32 %v430, %v430
      %v463 = vmul.f32 %v431, %v431
      %v464 = vmul.f32 %v432, %v432
      %v465 = vmul.f32 %v433, %v433
      %v466 = vmul.f32 %v434, %v434
      %v467 = vmul.f32 %v435, %v435
      %v468 = vmul.f32 %v436, %v436
      %v469 = vmul.f32 %v437, %v437
      %v470 = vmul.f32 %v438, %v438
      %v471 = vmul.f32 %v439, %v439
      %v472 = vmul.f32 %v440, %v440
      %v473 = vmul.f32 %v441, %v441
      %v474 = vmul.f32 %v442, %v442
      %v475 = vmul.f32 %v459, -0.5
      %v476 = vmul.f32 %v460, -0.5
      %v477 = vmul.f32 %v461, -0.5
      %v478 = vmul.f32 %v462, -0.5
      %v479 = vmul.f32 %v463, -0.5
      %v480 = vmul.f32 %v464, -0.5
      %v481 = vmul.f32 %v465, -0.5
      %v482 = vmul.f32 %v466, -0.5
      %v483 = vmul.f32 %v467, -0.5
      %v484 = vmul.f32 %v468, -0.5
      %v485 = vmul.f32 %v469, -0.5
      %v486 = vmul.f32 %v470, -0.5
      %v487 = vmul.f32 %v471, -0.5
      %v488 = vmul.f32 %v472, -0.5
      %v489 = vmul.f32 %v473, -0.5
      %v490 = vmul.f32 %v474, -0.5
      %v491 = vsel %vm224, 1, 0
      %v492 = vlaneseq
      %v493 = vshrl.u32 %v492, 7
      %v494 = vsub.s32 0, %v493
      %v495 = vrot.slane %v491, %v494
      %vm496 = vcmp.eq.s32.totalorder %v495, 1
      %v497 = vsel %vm496, %v443, %v475
      %v498 = vsel %vm496, %v444, %v476
      %v499 = vsel %vm496, %v445, %v477
      %v500 = vsel %vm496, %v446, %v478
      %v501 = vsel %vm496, %v447, %v479
      %v502 = vsel %vm496, %v448, %v480
      %v503 = vsel %vm496, %v449, %v481
      %v504 = vsel %vm496, %v450, %v482
      %v505 = vsel %vm496, %v451, %v483
      %v506 = vsel %vm496, %v452, %v484
      %v507 = vsel %vm496, %v453, %v485
      %v508 = vsel %vm496, %v454, %v486
      %v509 = vsel %vm496, %v455, %v487
      %v510 = vsel %vm496, %v456, %v488
      %v511 = vsel %vm496, %v457, %v489
      %v512 = vsel %vm496, %v458, %v490
      %v513 = vmul.f32 %v497, 1.442695
      %v514 = vpow.pop %v513
      %v515 = vmul.f32 %v498, 1.442695
      %v516 = vpow.pop %v515
      %v517 = vmul.f32 %v499, 1.442695
      %v518 = vpow.pop %v517
      %v519 = vmul.f32 %v500, 1.442695
      %v520 = vpow.pop %v519
      %v521 = vmul.f32 %v501, 1.442695
      %v522 = vpow.pop %v521
      %v523 = vmul.f32 %v502, 1.442695
      %v524 = vpow.pop %v523
      %v525 = vmul.f32 %v503, 1.442695
      %v526 = vpow.pop %v525
      %v527 = vmul.f32 %v504, 1.442695
      %v528 = vpow.pop %v527
      %v529 = vmul.f32 %v505, 1.442695
      %v530 = vpow.pop %v529
      %v531 = vmul.f32 %v506, 1.442695
      %v532 = vpow.pop %v531
      %v533 = vmul.f32 %v507, 1.442695
      %v534 = vpow.pop %v533
      %v535 = vmul.f32 %v508, 1.442695
      %v536 = vpow.pop %v535
      %v537 = vmul.f32 %v509, 1.442695
      %v538 = vpow.pop %v537
      %v539 = vmul.f32 %v510, 1.442695
      %v540 = vpow.pop %v539
      %v541 = vmul.f32 %v511, 1.442695
      %v542 = vpow.pop %v541
      %v543 = vmul.f32 %v512, 1.442695
      %v544 = vpow.pop %v543
      %v545 = vadd.f32 %v514, 1.0
      %v546 = vadd.f32 %v516, 1.0
      %v547 = vadd.f32 %v518, 1.0
      %v548 = vadd.f32 %v520, 1.0
      %v549 = vadd.f32 %v522, 1.0
      %v550 = vadd.f32 %v524, 1.0
      %v551 = vadd.f32 %v526, 1.0
      %v552 = vadd.f32 %v528, 1.0
      %v553 = vadd.f32 %v530, 1.0
      %v554 = vadd.f32 %v532, 1.0
      %v555 = vadd.f32 %v534, 1.0
      %v556 = vadd.f32 %v536, 1.0
      %v557 = vadd.f32 %v538, 1.0
      %v558 = vadd.f32 %v540, 1.0
      %v559 = vadd.f32 %v542, 1.0
      %v560 = vadd.f32 %v544, 1.0
      %v561 = vrcp.pop %v545
      %v562 = vrcp.pop %v546
      %v563 = vrcp.pop %v547
      %v564 = vrcp.pop %v548
      %v565 = vrcp.pop %v549
      %v566 = vrcp.pop %v550
      %v567 = vrcp.pop %v551
      %v568 = vrcp.pop %v552
      %v569 = vrcp.pop %v553
      %v570 = vrcp.pop %v554
      %v571 = vrcp.pop %v555
      %v572 = vrcp.pop %v556
      %v573 = vrcp.pop %v557
      %v574 = vrcp.pop %v558
      %v575 = vrcp.pop %v559
      %v576 = vrcp.pop %v560
      %v577 = vmul.f32 %v345, %v561
      %v578 = vmul.f32 %v350, %v562
      %v579 = vmul.f32 %v355, %v563
      %v580 = vmul.f32 %v360, %v564
      %v581 = vmul.f32 %v365, %v565
      %v582 = vmul.f32 %v370, %v566
      %v583 = vmul.f32 %v375, %v567
      %v584 = vmul.f32 %v380, %v568
      %v585 = vmul.f32 %v385, %v569
      %v586 = vmul.f32 %v390, %v570
      %v587 = vmul.f32 %v395, %v571
      %v588 = vmul.f32 %v400, %v572
      %v589 = vmul.f32 %v405, %v573
      %v590 = vmul.f32 %v410, %v574
      %v591 = vmul.f32 %v415, %v575
      %v592 = vmul.f32 %v420, %v576
      %v593 = vsel %vm496, %v577, %v514
      %v594 = vsel %vm496, %v578, %v516
      %v595 = vsel %vm496, %v579, %v518
      %v596 = vsel %vm496, %v580, %v520
      %v597 = vsel %vm496, %v581, %v522
      %v598 = vsel %vm496, %v582, %v524
      %v599 = vsel %vm496, %v583, %v526
      %v600 = vsel %vm496, %v584, %v528
      %v601 = vsel %vm496, %v585, %v530
      %v602 = vsel %vm496, %v586, %v532
      %v603 = vsel %vm496, %v587, %v534
      %v604 = vsel %vm496, %v588, %v536
      %v605 = vsel %vm496, %v589, %v538
      %v606 = vsel %vm496, %v590, %v540
      %v607 = vsel %vm496, %v591, %v542
      %v608 = vsel %vm496, %v592, %v544
      %vm609 = vcmask 293888
      %v611 = vsel %vm609, %v593, 0
      %v614 = vsel %vm609, %v594, 0
      %v617 = vsel %vm609, %v595, 0
      %v620 = vsel %vm609, %v596, 0
      %v623 = vsel %vm609, %v597, 0
      %v626 = vsel %vm609, %v598, 0
      %v629 = vsel %vm609, %v599, 0
      %v632 = vsel %vm609, %v600, 0
      %v635 = vsel %vm609, %v601, 0
      %v638 = vsel %vm609, %v602, 0
      %v641 = vsel %vm609, %v603, 0
      %v644 = vsel %vm609, %v604, 0
      %v647 = vsel %vm609, %v605, 0
      %v650 = vsel %vm609, %v606, 0
      %v653 = vsel %vm609, %v607, 0
      %v656 = vsel %vm609, %v608, 0
      %v659 = vsel %vm274, %v223, 0
      %661 = vmatprep.subr.mxu0 0.0
      %662 = vmatpush1.msra.mxu0 %v219
      %663 = vmatprep.subr.mxu0 0.0
      %664 = vmatpush1.msra.mxu0 %v220
      %665 = vmatprep.subr.mxu0 0.0
      %666 = vmatpush1.msra.mxu0 %v221
      %667 = vmatprep.subr.mxu0 0.0
      %668 = vmatpush1.msra.mxu0 %v222
      %669 = vmatprep.subr.mxu0 0.0
      %670 = vmatpush1.msra.mxu0 %v659
      %671 = vmatprep.subr.mxu0 0.0
      %672 = vmatpush1.msra.mxu0 0.0
      %673 = vmatprep.subr.mxu0 0.0
      %674 = vmatpush1.msra.mxu0 0.0
      %675 = vmatprep.subr.mxu0 0.0
      %676 = vmatpush1.msra.mxu0 0.0
      %677 = vmatprep.subr.mxu0 0.0
      %678 = vmatpush1.msra.mxu0 0.0
      %679 = vmatprep.subr.mxu0 0.0
      %680 = vmatpush1.msra.mxu0 0.0
      %681 = vmatprep.subr.mxu0 0.0
      %682 = vmatpush1.msra.mxu0 0.0
      %683 = vmatprep.subr.mxu0 0.0
      %684 = vmatpush1.msra.mxu0 0.0
      %685 = vmatprep.subr.mxu0 0.0
      %686 = vmatpush1.msra.mxu0 0.0
      %687 = vmatprep.subr.mxu0 0.0
      %688 = vmatpush1.msra.mxu0 0.0
      %689 = vmatprep.subr.mxu0 0.0
      %690 = vmatpush1.msra.mxu0 0.0
      %691 = vmatprep.subr.mxu0 0.0
      %692 = vmatpush1.msra.mxu0 0.0
      %693 = vmatprep.subr.mxu0 0.0
      %694 = vmatpush1.msra.mxu0 0.0
      %695 = vmatprep.subr.mxu0 0.0
      %696 = vmatpush1.msra.mxu0 0.0
      %697 = vmatprep.subr.mxu0 0.0
      %698 = vmatpush1.msra.mxu0 0.0
      %699 = vmatprep.subr.mxu0 0.0
      %700 = vmatpush1.msra.mxu0 0.0
      %701 = vmatprep.subr.mxu0 0.0
      %702 = vmatpush1.msra.mxu0 0.0
      %703 = vmatprep.subr.mxu0 0.0
      %704 = vmatpush1.msra.mxu0 0.0
      %705 = vmatprep.subr.mxu0 0.0
      %706 = vmatpush1.msra.mxu0 0.0
      %707 = vmatprep.subr.mxu0 0.0
      %708 = vmatpush1.msra.mxu0 0.0
      %709 = vmatprep.subr.mxu0 0.0
      %710 = vmatpush1.msra.mxu0 0.0
      %711 = vmatprep.subr.mxu0 0.0
      %712 = vmatpush1.msra.mxu0 0.0
      %713 = vmatprep.subr.mxu0 0.0
      %714 = vmatpush1.msra.mxu0 0.0
      %715 = vmatprep.subr.mxu0 0.0
      %716 = vmatpush1.msra.mxu0 0.0
      %717 = vmatprep.subr.mxu0 0.0
      %718 = vmatpush1.msra.mxu0 0.0
      %719 = vmatprep.subr.mxu0 0.0
      %720 = vmatpush1.msra.mxu0 0.0
      %721 = vmatprep.subr.mxu0 0.0
      %722 = vmatpush1.msra.mxu0 0.0
      %723 = vmatprep.subr.mxu0 0.0
      %724 = vmatpush1.msra.mxu0 0.0
      %725 = vmatprep.mubr.f32.mxu0 0.0
      %726 = vmatmul.mubr.f32.gmra.mrb[0].mxu0 %v611
      %v727 = vpop.f32.mrb[0].mxu0
      %v728 = vadd.f32 0.0, %v727
      %v729 = vpop.f32.mrb[0].mxu0
      %730 = vmatprep.mubr.f32.mxu0 0.0
      %731 = vmatmul.mubr.f32.gmra.mrb[0].mxu0 %v614
      %v732 = vpop.f32.mrb[0].mxu0
      %v733 = vadd.f32 0.0, %v732
      %v734 = vpop.f32.mrb[0].mxu0
      %735 = vmatprep.mubr.f32.mxu0 0.0
      %736 = vmatmul.mubr.f32.gmra.mrb[0].mxu0 %v617
      %v737 = vpop.f32.mrb[0].mxu0
      %v738 = vadd.f32 0.0, %v737
      %v739 = vpop.f32.mrb[0].mxu0
      %740 = vmatprep.mubr.f32.mxu0 0.0
      %741 = vmatmul.mubr.f32.gmra.mrb[0].mxu0 %v620
      %v742 = vpop.f32.mrb[0].mxu0
      %v743 = vadd.f32 0.0, %v742
      %v744 = vpop.f32.mrb[0].mxu0
      %745 = vmatprep.mubr.f32.mxu0 0.0
      %746 = vmatmul.mubr.f32.gmra.mrb[0].mxu0 %v623
      %v747 = vpop.f32.mrb[0].mxu0
      %v748 = vadd.f32 0.0, %v747
      %v749 = vpop.f32.mrb[0].mxu0
      %750 = vmatprep.mubr.f32.mxu0 0.0
      %751 = vmatmul.mubr.f32.gmra.mrb[0].mxu0 %v626
      %v752 = vpop.f32.mrb[0].mxu0
      %v753 = vadd.f32 0.0, %v752
      %v754 = vpop.f32.mrb[0].mxu0
      %755 = vmatprep.mubr.f32.mxu0 0.0
      %756 = vmatmul.mubr.f32.gmra.mrb[0].mxu0 %v629
      %v757 = vpop.f32.mrb[0].mxu0
      %v758 = vadd.f32 0.0, %v757
      %v759 = vpop.f32.mrb[0].mxu0
      %760 = vmatprep.mubr.f32.mxu0 0.0
      %761 = vmatmul.mubr.f32.gmra.mrb[0].mxu0 %v632
      %v762 = vpop.f32.mrb[0].mxu0
      %v763 = vadd.f32 0.0, %v762
      %v764 = vpop.f32.mrb[0].mxu0
      %765 = vmatprep.mubr.f32.mxu0 0.0
      %766 = vmatmul.mubr.f32.gmra.mrb[0].mxu0 %v635
      %v767 = vpop.f32.mrb[0].mxu0
      %v768 = vadd.f32 0.0, %v767
      %v769 = vpop.f32.mrb[0].mxu0
      %770 = vmatprep.mubr.f32.mxu0 0.0
      %771 = vmatmul.mubr.f32.gmra.mrb[0].mxu0 %v638
      %v772 = vpop.f32.mrb[0].mxu0
      %v773 = vadd.f32 0.0, %v772
      %v774 = vpop.f32.mrb[0].mxu0
      %775 = vmatprep.mubr.f32.mxu0 0.0
      %776 = vmatmul.mubr.f32.gmra.mrb[0].mxu0 %v641
      %v777 = vpop.f32.mrb[0].mxu0
      %v778 = vadd.f32 0.0, %v777
      %v779 = vpop.f32.mrb[0].mxu0
      %780 = vmatprep.mubr.f32.mxu0 0.0
      %781 = vmatmul.mubr.f32.gmra.mrb[0].mxu0 %v644
      %v782 = vpop.f32.mrb[0].mxu0
      %v783 = vadd.f32 0.0, %v782
      %v784 = vpop.f32.mrb[0].mxu0
      %785 = vmatprep.mubr.f32.mxu0 0.0
      %786 = vmatmul.mubr.f32.gmra.mrb[0].mxu0 %v647
      %v787 = vpop.f32.mrb[0].mxu0
      %v788 = vadd.f32 0.0, %v787
      %v789 = vpop.f32.mrb[0].mxu0
      %790 = vmatprep.mubr.f32.mxu0 0.0
      %791 = vmatmul.mubr.f32.gmra.mrb[0].mxu0 %v650
      %v792 = vpop.f32.mrb[0].mxu0
      %v793 = vadd.f32 0.0, %v792
      %v794 = vpop.f32.mrb[0].mxu0
      %795 = vmatprep.mubr.f32.mxu0 0.0
      %796 = vmatmul.mubr.f32.gmra.mrb[0].mxu0 %v653
      %v797 = vpop.f32.mrb[0].mxu0
      %v798 = vadd.f32 0.0, %v797
      %v799 = vpop.f32.mrb[0].mxu0
      %800 = vmatprep.mubr.f32.mxu0 0.0
      %801 = vmatmul.mubr.f32.gmra.mrb[0].mxu0 %v656
      %v802 = vpop.f32.mrb[0].mxu0
      %v803 = vadd.f32 0.0, %v802
      %v804 = vpop.f32.mrb[0].mxu0
      %805 = vdwg.mxu0
      %806 = vst [vmem:[%s199] sm:$0xff] %v728
      %807 = vst [vmem:[%s199 + $0x8] sm:$0xff] %v733
      %808 = vst [vmem:[%s199 + $0x10] sm:$0xff] %v738
      %809 = vst [vmem:[%s199 + $0x18] sm:$0xff] %v743
      %810 = vst [vmem:[%s199 + $0x20] sm:$0xff] %v748
      %811 = vst [vmem:[%s199 + $0x28] sm:$0xff] %v753
      %812 = vst [vmem:[%s199 + $0x30] sm:$0xff] %v758
      %813 = vst [vmem:[%s199 + $0x38] sm:$0xff] %v763
      %814 = vst [vmem:[%s199 + $0x40] sm:$0xff] %v768
      %815 = vst [vmem:[%s199 + $0x48] sm:$0xff] %v773
      %816 = vst [vmem:[%s199 + $0x50] sm:$0xff] %v778
      %817 = vst [vmem:[%s199 + $0x58] sm:$0xff] %v783
      %818 = vst [vmem:[%s199 + $0x60] sm:$0xff] %v788
      %819 = vst [vmem:[%s199 + $0x68] sm:$0xff] %v793
      %820 = vst [vmem:[%s199 + $0x70] sm:$0xff] %v798
      %821 = vst [vmem:[%s199 + $0x78] sm:$0xff] %v803
      %s822 = smul.u32 16, %s15
      %p823 = scmp.lt.s32.totalorder %s822, 31
      %s824 = scalar_select %p823, %s822, 31
      %s825 = smul.addr %s824, 8
      %s826 = scalar_lea.vmem %s4, %s825
      // Predicated region
      $region37: #{kan_embeddings_forward.1} parent=35 // pred_check
        %p827 = pneg %p122
      $region38: #{kan_embeddings_forward.1} parent=35 // pred_check_branch
        %829 = sbr.rel (%p827) target = $region40
      $region39: #{kan_embeddings_forward.1} parent=35 // pred_region
        %s830 = smul.u32 16, %s15
      $region40: #{kan_embeddings_forward.1} parent=35 // pred_fallthru
        _
    $region36: #{kan_embeddings_forward.1} parent=5 // pred_fallthru
      _
    %p831 = scmp.le.s32.totalorder 2, %s10
    // Predicated region
    $region41: #{kan_embeddings_forward.1} parent=5 // pred_check
      %p832 = pneg %p831
    $region42: #{kan_embeddings_forward.1} parent=5 // pred_check_branch
      %834 = sbr.rel (%p832) target = $region44
    $region43: #{kan_embeddings_forward.1} parent=5 // pred_region
      %s835 = ssub.s32 %s10, 2
      // Predicated region
      $region45: #{kan_embeddings_forward.1} parent=43 // pred_check
        %p836 = pneg %p128
      $region46: #{kan_embeddings_forward.1} parent=43 // pred_check_branch
        %838 = sbr.rel (%p836) target = $region48
      $region47: #{kan_embeddings_forward.1} parent=43 // pred_region
        %s839 = smul.u32 16, %s16
        %p840 = scmp.lt.s32.totalorder %s839, 31
        %s841 = scalar_select %p840, %s839, 31
        %s842 = smul.addr %s841, 8
        %s843 = scalar_lea.vmem %s4, %s842
      $region48: #{kan_embeddings_forward.1} parent=43 // pred_fallthru
        _
    $region44: #{kan_embeddings_forward.1} parent=5 // pred_fallthru
      _
  $region6: #{kan_embeddings_forward.1} parent=0 // loop_footer
    %s14 = sadd.s32 1, %s10
  $region7: #{kan_embeddings_forward.1} parent=0 // loop_footer_branch
    %9 = sbr.rel target = $region3
  $region8: #{kan_embeddings_forward.1} parent=0 // loop_exit
    _

</llo_original>
